<compile_context>
chip_gen: v7x
topology: tpu7x:2x2x1
jax: 0.10.0
libtpu: 0.0.40
codegen_flags: <defaults>
</compile_context>

<pallas_src>
import math

import numpy as np
import jax
import jax.numpy as jnp
from jax.experimental import pallas as pl
from jax.experimental.pallas import tpu as pltpu


def _round_up(x, m):
    return ((x + m - 1) // m) * m


def _vmem_capacity_bytes():
    """Physical VMEM of the current TPU generation (fallback: v7x 64 MiB)."""
    try:
        info = pltpu.get_tpu_info()
        cap = getattr(info, "vmem_capacity_bytes", None)
        if cap:
            return int(cap)
    except Exception:
        pass
    return 64 * 1024 * 1024


# ---------------------------------------------------------------------------
# Pallas kernel: one (tm, tn) output tile of the fused linear + LoRA-QKV.
#   grid = (M/tm, N/tn); j (N axis) is innermost and marked "arbitrary" since
#   the a_scratch (x @ A^T) computed at j == 0 is reused across all j.
# ---------------------------------------------------------------------------
def lora_qkv_kernel(x_ref, wt_ref, bias_ref, at_ref, bft_ref, o_ref, a_scratch):
    j = pl.program_id(1)

    # Hoisted skinny projection: compute x @ A^T once per row tile, keep it
    # resident in VMEM across every N tile of this row tile.
    @pl.when(j == 0)
    def _():
        a_scratch[...] = jnp.dot(
            x_ref[...], at_ref[...], preferred_element_type=jnp.float32
        ).astype(a_scratch.dtype)

    # Pretrained path: x @ W^T  (bf16 MXU operands, f32 accumulation).
    acc = jnp.dot(x_ref[...], wt_ref[...], preferred_element_type=jnp.float32)
    # LoRA path: (x @ A^T) @ B_full_scaled^T  (scaling pre-folded into bft).
    acc = acc + jnp.dot(a_scratch[...], bft_ref[...],
                        preferred_element_type=jnp.float32)

    # Epilogue: single f32 bias add from the fully-resident bias row, then a
    # lane-dense (128-multiple) store.
    tn = o_ref.shape[1]
    off = pl.multiple_of(j * tn, 128)
    o_ref[...] = (acc + bias_ref[:, pl.ds(off, tn)]).astype(o_ref.dtype)


# ---------------------------------------------------------------------------
# One-time parameter preparation (hoisted out of the per-call hot path):
# fold conv1d block structure + zero_pad scatter + alpha/r scaling into one
# dense B_full, transpose / cast to bf16 / pad everything to 128-lane tiles.
# ---------------------------------------------------------------------------
def build_lora_ind(out_features, head_size, n_head, n_query_groups, enable_lora):
    enable_q, enable_k, enable_v = enable_lora
    qkv_group_size = n_head // n_query_groups + 2
    idx = np.arange(out_features)
    blk = (idx // head_size) % qkv_group_size
    lora_ind = []
    if enable_q:
        lora_ind.extend(idx[blk < qkv_group_size - 2].tolist())
    if enable_k:
        lora_ind.extend(idx[blk == qkv_group_size - 2].tolist())
    if enable_v:
        lora_ind.extend(idx[blk == qkv_group_size - 1].tolist())
    return np.array(lora_ind, dtype=np.int64)


def build_b_full(lora_B, qkv_shapes, r, lora_ind, out_features, scaling):
    """lora_B: (sum(qkv_shapes), r) -> (out_features, r*n_blocks), scaled."""
    n_blocks = len(qkv_shapes)
    r_total = r * n_blocks
    beff = np.zeros((sum(qkv_shapes), r_total), dtype=np.float32)
    row = 0
    for i, s in enumerate(qkv_shapes):
        beff[row:row + s, i * r:(i + 1) * r] = lora_B[row:row + s, :]
        row += s
    b_full = np.zeros((out_features, r_total), dtype=np.float32)
    b_full[lora_ind, :] = beff
    return b_full * scaling


def prepare_lora_qkv_params(w, bias, lora_A, lora_B, qkv_shapes, r, lora_ind,
                            out_features, scaling, compute_dtype=jnp.bfloat16):
    """One-time prep: returns pre-transposed / pre-cast / pre-padded operands."""
    in_features = w.shape[1]
    r_total = lora_A.shape[0]
    r_pad = _round_up(max(r_total, 8), 8)
    n_pad = _round_up(out_features, 128)

    b_full = build_b_full(np.asarray(lora_B), qkv_shapes, r, lora_ind,
                          out_features, scaling)               # (out, r_total) f32

    wt = jnp.pad(jnp.asarray(w).T.astype(compute_dtype),
                 ((0, 0), (0, n_pad - out_features)))          # (in, n_pad)
    bft = jnp.pad(jnp.asarray(b_full.T, dtype=compute_dtype),
                  ((0, r_pad - r_total), (0, n_pad - out_features)))  # (r_pad, n_pad)
    at = jnp.pad(jnp.asarray(lora_A).T.astype(compute_dtype),
                 ((0, 0), (0, r_pad - r_total)))               # (in, r_pad)
    bias2 = jnp.pad(jnp.asarray(bias).astype(jnp.float32).reshape(1, -1),
                    ((0, 0), (0, n_pad - out_features)))       # (1, n_pad) f32

    return dict(wt=wt, bias=bias2, at=at, bft=bft,
                out_features=out_features, in_features=in_features)


# ---------------------------------------------------------------------------
# Forward: x (B, T, in) -> (B, T, out).
# ---------------------------------------------------------------------------
def lora_qkv_forward(x, params, *, tm=512, tn=512, out_dtype=jnp.float32):
    wt, bias2, at, bft = params["wt"], params["bias"], params["at"], params["bft"]
    out_features = params["out_features"]
    in_features, n_pad = wt.shape
    r_pad = at.shape[1]
    compute_dtype = wt.dtype

    B, T, _ = x.shape
    M = B * T

    # Row tile: big for prefill, but never over-pad decode-shaped (small M)
    # calls — only pad to the 16-row bf16 sublane multiple.
    tm = max(16, min(tm, _round_up(M, 16)))
    m_pad = _round_up(M, tm)

    # Column tile: multiple of 128 that divides n_pad (lane-dense stores, no
    # partially-masked vst, and no leftover N tile).
    tn = max(128, (min(tn, n_pad) // 128) * 128)
    while n_pad % tn:
        tn -= 128

    # Generation-aware VMEM budget with explicit double-buffer accounting.
    cap = _vmem_capacity_bytes()
    budget = int(0.80 * cap)
    isz = jnp.dtype(compute_dtype).itemsize
    osz = jnp.dtype(out_dtype).itemsize

    def vmem_needed(tm_, tn_):
        return (2 * (tm_ * in_features + in_features * tn_ + r_pad * tn_) * isz  # x, W^T, B^T (dbl-buf)
                + 2 * in_features * r_pad * isz                                   # A^T (dbl-buf)
                + 2 * n_pad * 4                                                   # bias (f32, dbl-buf)
                + 2 * tm_ * tn_ * osz                                             # out tile (dbl-buf)
                + tm_ * r_pad * isz)                                              # after_A scratch

    # Shrink tn first (W streaming is invariant in tn); only then tm.
    # TODO(synk): for very large in_features, prefer adding a K ("arbitrary")
    # grid axis with an f32 accumulator instead of shrinking the M/N tiles.
    while vmem_needed(tm, tn) > budget and (tm > 16 or tn > 128):
        if tn > 128:
            tn -= 128
            while n_pad % tn:
                tn -= 128
        else:
            tm = max(16, _round_up(tm // 2, 16))
            m_pad = _round_up(M, tm)

    vmem_limit = int(min(cap, max(int(1.25 * vmem_needed(tm, tn)) + (1 << 20),
                                  16 * 1024 * 1024)))

    # Input rows (bf16); pad only if a partial row tile exists.
    x2 = x.reshape(M, in_features).astype(compute_dtype)
    if m_pad != M:
        x2 = jnp.pad(x2, ((0, m_pad - M), (0, 0)))

    grid = (m_pad // tm, n_pad // tn)

    out = pl.pallas_call(
        lora_qkv_kernel,
        out_shape=jax.ShapeDtypeStruct((m_pad, n_pad), out_dtype),
        grid=grid,
        in_specs=[
            pl.BlockSpec((tm, in_features), lambda i, j: (i, 0)),      # x row tile
            pl.BlockSpec((in_features, tn), lambda i, j: (0, j)),      # W^T column panel
            pl.BlockSpec((1, n_pad), lambda i, j: (0, 0)),             # bias (fully resident)
            pl.BlockSpec((in_features, r_pad), lambda i, j: (0, 0)),   # A^T (small, resident)
            pl.BlockSpec((r_pad, tn), lambda i, j: (0, j)),            # scaled B_full^T panel
        ],
        out_specs=pl.BlockSpec((tm, tn), lambda i, j: (i, j)),
        scratch_shapes=[pltpu.VMEM((tm, r_pad), compute_dtype)],       # after_A per row tile
        compiler_params=pltpu.CompilerParams(
            dimension_semantics=("parallel", "arbitrary"),
            vmem_limit_bytes=vmem_limit),
    )(x2, wt, bias2, at, bft)

    # Skip the extra HBM read/write of a slice when no padding was introduced.
    if m_pad != M or n_pad != out_features:
        out = out[:M, :out_features]
    return out.reshape(B, T, out_features)


# ---------------------------------------------------------------------------
# Pure-numpy reference mirroring the PyTorch forward literally.
# ---------------------------------------------------------------------------
def reference_forward(x, w, bias, lora_A, lora_B, qkv_shapes, r, lora_ind,
                      out_features, scaling):
    x = np.asarray(x, np.float32)
    pretrained = x @ np.asarray(w).T + np.asarray(bias)
    after_A = x @ np.asarray(lora_A).T                     # (B, T, r_total)
    blocks = []
    row = 0
    for i, s in enumerate(qkv_shapes):                     # conv1d (k=1) == block matmul
        a_i = after_A[..., i * r:(i + 1) * r]
        b_i = np.asarray(lora_B)[row:row + s, :]
        blocks.append(a_i @ b_i.T)
        row += s
    after_B = np.concatenate(blocks, axis=-1)
    padded = np.zeros(after_B.shape[:-1] + (out_features,), np.float32)
    padded[..., lora_ind] = after_B                        # zero_pad scatter
    return pretrained + padded * scaling


if __name__ == "__main__":
    # ---- module config (small, consistent with LoRAQKVLinear.__init__) ----
    head_size = 16
    n_head = 8
    n_query_groups = 2            # GQA: qkv_group_size = 8//2 + 2 = 6
    in_features = head_size * n_head                           # 128
    out_features = head_size * (n_head + 2 * n_query_groups)   # 192
    r = 4
    lora_alpha = 8
    enable_lora = (True, False, True)                          # Q and V only (exercises zero_pad)
    scaling = lora_alpha / r

    n_enabled = sum(enable_lora)
    r_total = r * n_enabled
    enable_q, enable_k, enable_v = enable_lora
    qkv_shapes_all = (head_size * n_head * enable_q,
                      head_size * n_query_groups * enable_k,
                      head_size * n_query_groups * enable_v)
    qkv_shapes = [s for s in qkv_shapes_all if s]

    # ---- deterministic parameter / input init ----
    key = jax.random.PRNGKey(0)
    k_x, k_w, k_b, k_a, k_bb = jax.random.split(key, 5)
    B, T = 2, 8
    x = jax.random.normal(k_x, (B, T, in_features), dtype=jnp.float32)
    w = 0.02 * jax.random.normal(k_w, (out_features, in_features), dtype=jnp.float32)
    bias = 0.01 * jax.random.normal(k_b, (out_features,), dtype=jnp.float32)
    lora_A = (1.0 / math.sqrt(in_features)) * jax.random.normal(
        k_a, (r_total, in_features), dtype=jnp.float32)
    # NOTE: PyTorch init zeros lora_B; use nonzero values so the LoRA path is exercised.
    lora_B = 0.05 * jax.random.normal(k_bb, (sum(qkv_shapes), r), dtype=jnp.float32)

    # ---- one-time parameter prep (conv1d + zero_pad + scaling folded in) ----
    lora_ind = build_lora_ind(out_features, head_size, n_head, n_query_groups, enable_lora)
    params = prepare_lora_qkv_params(w, bias, lora_A, lora_B, qkv_shapes, r,
                                     lora_ind, out_features, scaling)

    # ---- run fused Pallas kernel ----
    out = lora_qkv_forward(x, params, tm=512, tn=512, out_dtype=jnp.float32)
    out = jax.block_until_ready(out)

    # ---- check against literal PyTorch-semantics reference ----
    ref = reference_forward(np.asarray(x), np.asarray(w), np.asarray(bias),
                            np.asarray(lora_A), np.asarray(lora_B),
                            qkv_shapes, r, lora_ind, out_features, scaling)
    assert out.shape == (B, T, out_features)
    np.testing.assert_allclose(np.asarray(out), ref, rtol=3e-2, atol=3e-2)

    print("KERNEL_OK")
</pallas_src>

<mosaic_0001>
module attributes {stable_mosaic.version = 11 : i64} {
  func.func @lora_qkv_kernel(%arg0: i32, %arg1: i32, %arg2: memref<16x128xbf16, #tpu.memory_space<vmem>>, %arg3: memref<128x256xbf16, #tpu.memory_space<vmem>>, %arg4: memref<1x256xf32, #tpu.memory_space<vmem>>, %arg5: memref<128x8xbf16, #tpu.memory_space<vmem>>, %arg6: memref<8x256xbf16, #tpu.memory_space<vmem>>, %arg7: memref<16x256xf32, #tpu.memory_space<vmem>>, %arg8: memref<16x8xbf16, #tpu.memory_space<vmem>>) attributes {dimension_semantics = [#tpu.dimension_semantics<parallel>, #tpu.dimension_semantics<arbitrary>], iteration_bounds = array<i64: 1, 1>, scalar_prefetch = 0 : i64, scratch_operands = 1 : i64, tpu.core_type = #tpu.core_type<tc>, window_params = [{transform_indices = @transform_0, window_bounds = array<i64: 16, 128>}, {transform_indices = @transform_1, window_bounds = array<i64: 128, 256>}, {pipeline_mode = #tpu.pipeline_mode<synchronous>, transform_indices = @transform_2, window_bounds = array<i64: 1, 256>}, {pipeline_mode = #tpu.pipeline_mode<synchronous>, transform_indices = @transform_3, window_bounds = array<i64: 128, 8>}, {transform_indices = @transform_4, window_bounds = array<i64: 8, 256>}, {transform_indices = @transform_5, window_bounds = array<i64: 16, 256>}]} {
    %c0_i32 = arith.constant 0 : i32
    %0 = arith.cmpi eq, %arg1, %c0_i32 : i32
    %1 = arith.extui %0 : i1 to i32
    %c0_i32_0 = arith.constant 0 : i32
    %2 = arith.cmpi ne, %1, %c0_i32_0 : i32
    scf.if %2 {
      %c0_12 = arith.constant 0 : index
      %c0_13 = arith.constant 0 : index
      %17 = vector.load %arg2[%c0_12, %c0_13] : memref<16x128xbf16, #tpu.memory_space<vmem>>, vector<16x128xbf16>
      %c0_14 = arith.constant 0 : index
      %c0_15 = arith.constant 0 : index
      %18 = vector.load %arg5[%c0_14, %c0_15] : memref<128x8xbf16, #tpu.memory_space<vmem>>, vector<128x8xbf16>
      %cst_16 = arith.constant dense<0.000000e+00> : vector<16x8xf32>
      %19 = tpu.matmul %17, %18, %cst_16 {dimension_numbers = #tpu.dot_dimension_numbers<[1], [0], [0], [1], [0, 0, 1, 1], [], []>} : vector<16x128xbf16>, vector<128x8xbf16>, vector<16x8xf32> -> vector<16x8xf32>
      %20 = arith.truncf %19 : vector<16x8xf32> to vector<16x8xbf16>
      %c0_17 = arith.constant 0 : index
      %c0_18 = arith.constant 0 : index
      %21 = vector.load %arg8[%c0_17, %c0_18] : memref<16x8xbf16, #tpu.memory_space<vmem>>, vector<16x8xbf16>
      tpu.vector_store %arg8[%c0_17, %c0_18], %20 {strides = array<i32>} : memref<16x8xbf16, #tpu.memory_space<vmem>>, vector<16x8xbf16>,
    } else {
    }
    %c0 = arith.constant 0 : index
    %c0_1 = arith.constant 0 : index
    %3 = vector.load %arg2[%c0, %c0_1] : memref<16x128xbf16, #tpu.memory_space<vmem>>, vector<16x128xbf16>
    %c0_2 = arith.constant 0 : index
    %c0_3 = arith.constant 0 : index
    %4 = vector.load %arg3[%c0_2, %c0_3] : memref<128x256xbf16, #tpu.memory_space<vmem>>, vector<128x256xbf16>
    %cst = arith.constant dense<0.000000e+00> : vector<16x256xf32>
    %5 = tpu.matmul %3, %4, %cst {dimension_numbers = #tpu.dot_dimension_numbers<[1], [0], [0], [1], [0, 0, 1, 1], [], []>} : vector<16x128xbf16>, vector<128x256xbf16>, vector<16x256xf32> -> vector<16x256xf32>
    %c0_4 = arith.constant 0 : index
    %c0_5 = arith.constant 0 : index
    %6 = vector.load %arg8[%c0_4, %c0_5] : memref<16x8xbf16, #tpu.memory_space<vmem>>, vector<16x8xbf16>
    %c0_6 = arith.constant 0 : index
    %c0_7 = arith.constant 0 : index
    %7 = vector.load %arg6[%c0_6, %c0_7] : memref<8x256xbf16, #tpu.memory_space<vmem>>, vector<8x256xbf16>
    %cst_8 = arith.constant dense<0.000000e+00> : vector<16x256xf32>
    %8 = tpu.matmul %6, %7, %cst_8 {dimension_numbers = #tpu.dot_dimension_numbers<[1], [0], [0], [1], [0, 0, 1, 1], [], []>} : vector<16x8xbf16>, vector<8x256xbf16>, vector<16x256xf32> -> vector<16x256xf32>
    %9 = arith.addf %5, %8 : vector<16x256xf32>
    %c256_i32 = arith.constant 256 : i32
    %10 = arith.muli %arg1, %c256_i32 : i32
    %11 = tpu.assume_multiple %10, 128 : i32
    %c0_9 = arith.constant 0 : index
    %12 = arith.index_cast %11 : i32 to index
    %13 = vector.load %arg4[%c0_9, %12] : memref<1x256xf32, #tpu.memory_space<vmem>>, vector<1x256xf32>
    %14 = vector.broadcast %13 : vector<1x256xf32> to vector<16x256xf32>
    %15 = arith.addf %9, %14 : vector<16x256xf32>
    %c0_10 = arith.constant 0 : index
    %c0_11 = arith.constant 0 : index
    %16 = vector.load %arg7[%c0_10, %c0_11] : memref<16x256xf32, #tpu.memory_space<vmem>>, vector<16x256xf32>
    tpu.vector_store %arg7[%c0_10, %c0_11], %15 {strides = array<i32>} : memref<16x256xf32, #tpu.memory_space<vmem>>, vector<16x256xf32>,
    return
  }
  func.func @transform_0(%arg0: i32, %arg1: i32) -> (i32, i32) {
    %c0_i32 = arith.constant 0 : i32
    %c0_i32_0 = arith.constant 0 : i32
    return %arg0, %c0_i32 : i32, i32
  }
  func.func @transform_1(%arg0: i32, %arg1: i32) -> (i32, i32) {
    %c0_i32 = arith.constant 0 : i32
    %c0_i32_0 = arith.constant 0 : i32
    return %c0_i32, %arg1 : i32, i32
  }
  func.func @transform_2(%arg0: i32, %arg1: i32) -> (i32, i32) {
    %c0_i32 = arith.constant 0 : i32
    %c0_i32_0 = arith.constant 0 : i32
    %c0_i32_1 = arith.constant 0 : i32
    return %c0_i32, %c0_i32_0 : i32, i32
  }
  func.func @transform_3(%arg0: i32, %arg1: i32) -> (i32, i32) {
    %c0_i32 = arith.constant 0 : i32
    %c0_i32_0 = arith.constant 0 : i32
    %c0_i32_1 = arith.constant 0 : i32
    return %c0_i32, %c0_i32_0 : i32, i32
  }
  func.func @transform_4(%arg0: i32, %arg1: i32) -> (i32, i32) {
    %c0_i32 = arith.constant 0 : i32
    %c0_i32_0 = arith.constant 0 : i32
    return %c0_i32, %arg1 : i32, i32
  }
  func.func @transform_5(%arg0: i32, %arg1: i32) -> (i32, i32) {
    %c0_i32 = arith.constant 0 : i32
    return %arg0, %arg1 : i32, i32
  }
}

</mosaic_0001>

<llo_original>
// kernel: tpu_custom_call.1
$region0: #{tpu_custom_call.1}
  #allocation0 [shape = 'u32[]', space=smem, size = 0x4, offset = 0x4, fixed_abs, tag = 'smem constant byte address 0x4 - core index']
  #allocation1 [shape = 'u32[144,128]{1,0:T(1,128)}', space=vmem, size = 0x12000, scoped, tag = 'internal scratch']
  #allocation2 [shape = 'bf16[16,8]{1,0:T(16,128)(2,1)}', space=vmem, size = 0x1000, scoped, tag = 'scratch operand']
  %s0 = inlined_call_operand.vmem [shape: bf16[16,128], index: 0, kind: input, shape index: {}]
  %s1 = inlined_call_operand.hbm [shape: bf16[128,256], index: 1, kind: input, shape index: {}]
  %s2 = inlined_call_operand.vmem [shape: f32[1,256], index: 2, kind: input, shape index: {}]
  %s3 = inlined_call_operand.vmem [shape: bf16[128,8], index: 3, kind: input, shape index: {}]
  %s4 = inlined_call_operand.vmem [shape: bf16[8,256], index: 4, kind: input, shape index: {}]
  %s5 = inlined_call_operand.hbm [shape: f32[16,256], index: 5, kind: output, shape index: {}]
  %s6 = sld [smem:[#allocation0]]
  $region38: #{tpu_custom_call.1} parent=0
    _
  %s8 = ssub.s32 1, %s6
  %s9 = scalar_select 0, %s8, %s6
  $region1: #{tpu_custom_call.1} parent=0
    #allocation3 [shape = 'u8[65536]{0}', space=vmem, size = 0x10000, scoped, tag = 'input window, operand 1, single buffered']
    #allocation4 [shape = 's32[1]{0}', space=sflag, size = 0x4, scoped, tag = 'scoped memory for tpu_custom_call.1']
    #allocation5 [shape = 's32[1]{0}', space=sflag, size = 0x4, scoped, tag = 'scoped memory for tpu_custom_call.1']
    #allocation6 [shape = 'u8[16384]{0}', space=vmem, size = 0x4000, scoped, tag = 'output window, operand 0, single buffered']
    %10 = vsyncpa [#allocation4], 0
    %11 = vsyncpa [#allocation5], 0
    // Predicated region
    $region2: #{tpu_custom_call.1} parent=1 // pred_check
      _
    $region3: #{tpu_custom_call.1} parent=1 // pred_check_branch
      %13 = sbr.rel (0) target = $region5
    $region4: #{tpu_custom_call.1} parent=1 // pred_region
      _
    $region5: #{tpu_custom_call.1} parent=1 // pred_fallthru
      _
    // Predicated region
    $region6: #{tpu_custom_call.1} parent=1 // pred_check
      _
    $region7: #{tpu_custom_call.1} parent=1 // pred_check_branch
      %15 = sbr.rel (0) target = $region9
    $region8: #{tpu_custom_call.1} parent=1 // pred_region
      %s17 = ssub.s32 2048, 2048
      %18 = vsyncadd [#allocation4], %s17
      %s19 = sshll.u32 [#allocation3], 4
      %s20 = int_to_ptr.vmem [resolvable:$true] %s19
      %25 = dma.hbm_to_vmem [thread:$0]  %s1, 2048, %s20, [#allocation4], 128, 128, 8
    $region9: #{tpu_custom_call.1} parent=1 // pred_fallthru
      _
    // Predicated region
    $region10: #{tpu_custom_call.1} parent=1 // pred_check
      _
    $region11: #{tpu_custom_call.1} parent=1 // pred_check_branch
      %27 = sbr.rel (0) target = $region13
    $region12: #{tpu_custom_call.1} parent=1 // pred_region
      _
    $region13: #{tpu_custom_call.1} parent=1 // pred_fallthru
      _
    // Predicated region
    $region14: #{tpu_custom_call.1} parent=1 // pred_check
      _
    $region15: #{tpu_custom_call.1} parent=1 // pred_check_branch
      %29 = sbr.rel (0) target = $region17
    $region16: #{tpu_custom_call.1} parent=1 // pred_region
      _
    $region17: #{tpu_custom_call.1} parent=1 // pred_fallthru
      _
    // Predicated region
    $region18: #{tpu_custom_call.1} parent=1 // pred_check
      _
    $region19: #{tpu_custom_call.1} parent=1 // pred_check_branch
      %31 = sbr.rel (0) target = $region21
    $region20: #{tpu_custom_call.1} parent=1 // pred_region
      _
    $region21: #{tpu_custom_call.1} parent=1 // pred_fallthru
      _
    // Predicated region
    $region22: #{tpu_custom_call.1} parent=1 // pred_check
      _
    $region23: #{tpu_custom_call.1} parent=1 // pred_check_branch
      %33 = sbr.rel (0) target = $region25
    $region24: #{tpu_custom_call.1} parent=1 // pred_region
      %34 = dma.done [#allocation4], 2048
    $region25: #{tpu_custom_call.1} parent=1 // pred_fallthru
      _
    %p36 = scmp.eq.s32.totalorder 0, 0
    // Predicated region
    $region26: #{tpu_custom_call.1} parent=1 // pred_check
      %p37 = pneg %p36
    $region27: #{tpu_custom_call.1} parent=1 // pred_check_branch
      %39 = sbr.rel (%p37) target = $region29
    $region28: #{tpu_custom_call.1} parent=1 // pred_region
      %v40 = vld [vmem:[%s0] sm:$0xf]
      %v41 = vld [vmem:[%s0 + $0x4] sm:$0xf]
      %v42 = vld [vmem:[%s3] sm:$0xf]
      %v43 = vld [vmem:[%s3 + $0x4] sm:$0xf]
      %v44 = vld [vmem:[%s3 + $0x8] sm:$0xf]
      %v45 = vld [vmem:[%s3 + $0xc] sm:$0xf]
      %v46 = vld [vmem:[%s3 + $0x10] sm:$0xf]
      %v47 = vld [vmem:[%s3 + $0x14] sm:$0xf]
      %v48 = vld [vmem:[%s3 + $0x18] sm:$0xf]
      %v49 = vld [vmem:[%s3 + $0x1c] sm:$0xf]
      %v50 = vld [vmem:[%s3 + $0x20] sm:$0xf]
      %v51 = vld [vmem:[%s3 + $0x24] sm:$0xf]
      %v52 = vld [vmem:[%s3 + $0x28] sm:$0xf]
      %v53 = vld [vmem:[%s3 + $0x2c] sm:$0xf]
      %v54 = vld [vmem:[%s3 + $0x30] sm:$0xf]
      %v55 = vld [vmem:[%s3 + $0x34] sm:$0xf]
      %v56 = vld [vmem:[%s3 + $0x38] sm:$0xf]
      %v57 = vld [vmem:[%s3 + $0x3c] sm:$0xf]
      %v60 = vunpack.c.l.b16 %v40
      %v61 = vunpack.c.l.b16 %v41
      %v62 = vpack.c.b16 %v61, %v60
      %v80 = vunpack.c.l.b16 %v42
      %v81 = vunpack.c.l.b16 %v43
      %v82 = vunpack.c.l.b16 %v44
      %v83 = vunpack.c.l.b16 %v45
      %v84 = vunpack.c.l.b16 %v46
      %v85 = vunpack.c.l.b16 %v47
      %v86 = vunpack.c.l.b16 %v48
      %v87 = vunpack.c.l.b16 %v49
      %v88 = vunpack.c.l.b16 %v50
      %v89 = vunpack.c.l.b16 %v51
      %v90 = vunpack.c.l.b16 %v52
      %v91 = vunpack.c.l.b16 %v53
      %v92 = vunpack.c.l.b16 %v54
      %v93 = vunpack.c.l.b16 %v55
      %v94 = vunpack.c.l.b16 %v56
      %v95 = vunpack.c.l.b16 %v57
      %v96 = vpack.c.b16 %v81, %v80
      %v97 = vpack.c.b16 %v83, %v82
      %v98 = vpack.c.b16 %v85, %v84
      %v99 = vpack.c.b16 %v87, %v86
      %v100 = vpack.c.b16 %v89, %v88
      %v101 = vpack.c.b16 %v91, %v90
      %v102 = vpack.c.b16 %v93, %v92
      %v103 = vpack.c.b16 %v95, %v94
      %112 = vmatprep.subr.bf16.mxu0 0
      %113 = vmatpush1.bf16.msra.mxu0 %v96
      %114 = vmatprep.subr.bf16.mxu0 0
      %115 = vmatpush1.bf16.msra.mxu0 %v97
      %116 = vmatprep.subr.bf16.mxu0 0
      %117 = vmatpush1.bf16.msra.mxu0 %v98
      %118 = vmatprep.subr.bf16.mxu0 0
      %119 = vmatpush1.bf16.msra.mxu0 %v99
      %120 = vmatprep.subr.bf16.mxu0 0
      %121 = vmatpush1.bf16.msra.mxu0 %v100
      %122 = vmatprep.subr.bf16.mxu0 0
      %123 = vmatpush1.bf16.msra.mxu0 %v101
      %124 = vmatprep.subr.bf16.mxu0 0
      %125 = vmatpush1.bf16.msra.mxu0 %v102
      %126 = vmatprep.subr.bf16.mxu0 0
      %127 = vmatpush1.bf16.msra.mxu0 %v103
      %128 = vmatprep.subr.bf16.mxu0 0
      %129 = vmatpush1.bf16.msra.mxu0 0
      %130 = vmatprep.subr.bf16.mxu0 0
      %131 = vmatpush1.bf16.msra.mxu0 0
      %132 = vmatprep.subr.bf16.mxu0 0
      %133 = vmatpush1.bf16.msra.mxu0 0
      %134 = vmatprep.subr.bf16.mxu0 0
      %135 = vmatpush1.bf16.msra.mxu0 0
      %136 = vmatprep.subr.bf16.mxu0 0
      %137 = vmatpush1.bf16.msra.mxu0 0
      %138 = vmatprep.subr.bf16.mxu0 0
      %139 = vmatpush1.bf16.msra.mxu0 0
      %140 = vmatprep.subr.bf16.mxu0 0
      %141 = vmatpush1.bf16.msra.mxu0 0
      %142 = vmatprep.subr.bf16.mxu0 0
      %143 = vmatpush1.bf16.msra.mxu0 0
      %144 = vmatprep.mubr.bf16.mxu0 0
      %145 = vmatmul.mubr.bf16.gmra.mrb[0].mxu0 %v62
      %v146 = vpop.f32.mrb[0].mxu0
      %v147 = vadd.f32 0.0, %v146
      %v148 = vpop.f32.mrb[0].mxu0
      %v149 = vpop.f32.mrb[0].mxu0
      %v150 = vadd.f32 0.0, %v149
      %v151 = vpop.f32.mrb[0].mxu0
      %152 = vdwg.mxu0
      %v153 = vpack.c.bf16 %v150, %v147
      %vm154 = vcmask 64512
      %155 = vst.msk [vmem:[#allocation2] sm:$0xff] %vm154, %v153
    $region29: #{tpu_custom_call.1} parent=1 // pred_fallthru
      _
    %v156 = vld [vmem:[%s0] sm:$0xf]
    %v157 = vld [vmem:[%s0 + $0x4] sm:$0xf]
    %v158 = vld [vmem:[#allocation3] sm:$0xff]
    %v159 = vld [vmem:[#allocation3 + $0x8] sm:$0xff]
    %v160 = vld [vmem:[#allocation3 + $0x10] sm:$0xff]
    %v161 = vld [vmem:[#allocation3 + $0x18] sm:$0xff]
    %v162 = vld [vmem:[#allocation3 + $0x20] sm:$0xff]
    %v163 = vld [vmem:[#allocation3 + $0x28] sm:$0xff]
    %v164 = vld [vmem:[#allocation3 + $0x30] sm:$0xff]
    %v165 = vld [vmem:[#allocation3 + $0x38] sm:$0xff]
    %v166 = vld [vmem:[#allocation3 + $0x40] sm:$0xff]
    %v167 = vld [vmem:[#allocation3 + $0x48] sm:$0xff]
    %v168 = vld [vmem:[#allocation3 + $0x50] sm:$0xff]
    %v169 = vld [vmem:[#allocation3 + $0x58] sm:$0xff]
    %v170 = vld [vmem:[#allocation3 + $0x60] sm:$0xff]
    %v171 = vld [vmem:[#allocation3 + $0x68] sm:$0xff]
    %v172 = vld [vmem:[#allocation3 + $0x70] sm:$0xff]
    %v173 = vld [vmem:[#allocation3 + $0x78] sm:$0xff]
    %v174 = vld [vmem:[#allocation2] sm:$0xff]
    %v175 = vld [vmem:[%s4] sm:$0xff]
    %v177 = vunpack.c.l.b16 %v175
    %v178 = vunpack.c.h.b16 %v175
    %v179 = vpack.c.b16 %v177, %v177
    %v180 = vpack.c.b16 %v178, %v178
    %vm181 = vcmask 64512
    %v183 = vsel %vm181, %v174, 0
    %vm185 = vcmask 1043456
    %v187 = vsel %vm185, %v179, 0
    %v190 = vsel %vm185, %v180, 0
    %192 = vmatprep.subr.bf16.mxu0 %v190
    %193 = vmatpush1.bf16.msra.mxu0 %v187
    %194 = vmatprep.subr.bf16.mxu0 0
    %195 = vmatpush1.bf16.msra.mxu0 0
    %196 = vmatprep.subr.bf16.mxu0 0
    %197 = vmatpush1.bf16.msra.mxu0 0
    %198 = vmatprep.subr.bf16.mxu0 0
    %199 = vmatpush1.bf16.msra.mxu0 0
    %200 = vmatprep.subr.bf16.mxu0 0
    %201 = vmatpush1.bf16.msra.mxu0 0
    %202 = vmatprep.subr.bf16.mxu0 0
    %203 = vmatpush1.bf16.msra.mxu0 0
    %204 = vmatprep.subr.bf16.mxu0 0
    %205 = vmatpush1.bf16.msra.mxu0 0
    %206 = vmatprep.subr.bf16.mxu0 0
    %207 = vmatpush1.bf16.msra.mxu0 0
    %208 = vmatprep.subr.bf16.mxu0 0
    %209 = vmatpush1.bf16.msra.mxu0 0
    %210 = vmatprep.subr.bf16.mxu0 0
    %211 = vmatpush1.bf16.msra.mxu0 0
    %212 = vmatprep.subr.bf16.mxu0 0
    %213 = vmatpush1.bf16.msra.mxu0 0
    %214 = vmatprep.subr.bf16.mxu0 0
    %215 = vmatpush1.bf16.msra.mxu0 0
    %216 = vmatprep.subr.bf16.mxu0 0
    %217 = vmatpush1.bf16.msra.mxu0 0
    %218 = vmatprep.subr.bf16.mxu0 0
    %219 = vmatpush1.bf16.msra.mxu0 0
    %220 = vmatprep.subr.bf16.mxu0 0
    %221 = vmatpush1.bf16.msra.mxu0 0
    %222 = vmatprep.subr.bf16.mxu0 0
    %223 = vmatpush1.bf16.msra.mxu0 0
    %224 = vmatprep.mubr.bf16.mxu0 0
    %225 = vmatmul.mubr.bf16.gmra.mrb[0].mxu0 %v183
    %v226 = vpop.f32.mrb[0].mxu0
    %v227 = vadd.f32 0.0, %v226
    %v228 = vpop.f32.mrb[0].mxu0
    %v229 = vadd.f32 0.0, %v228
    %v230 = vpop.f32.mrb[0].mxu0
    %v231 = vadd.f32 0.0, %v230
    %v232 = vpop.f32.mrb[0].mxu0
    %v233 = vadd.f32 0.0, %v232
    %234 = vdwg.mxu0
    %v237 = vunpack.c.l.b16 %v156
    %v238 = vunpack.c.l.b16 %v157
    %v239 = vpack.c.b16 %v238, %v237
    %v257 = vunpack.c.l.b16 %v158
    %v258 = vunpack.c.h.b16 %v158
    %v259 = vunpack.c.l.b16 %v159
    %v260 = vunpack.c.h.b16 %v159
    %v261 = vunpack.c.l.b16 %v160
    %v262 = vunpack.c.h.b16 %v160
    %v263 = vunpack.c.l.b16 %v161
    %v264 = vunpack.c.h.b16 %v161
    %v265 = vunpack.c.l.b16 %v162
    %v266 = vunpack.c.h.b16 %v162
    %v267 = vunpack.c.l.b16 %v163
    %v268 = vunpack.c.h.b16 %v163
    %v269 = vunpack.c.l.b16 %v164
    %v270 = vunpack.c.h.b16 %v164
    %v271 = vunpack.c.l.b16 %v165
    %v272 = vunpack.c.h.b16 %v165
    %v273 = vunpack.c.l.b16 %v166
    %v274 = vunpack.c.h.b16 %v166
    %v275 = vunpack.c.l.b16 %v167
    %v276 = vunpack.c.h.b16 %v167
    %v277 = vunpack.c.l.b16 %v168
    %v278 = vunpack.c.h.b16 %v168
    %v279 = vunpack.c.l.b16 %v169
    %v280 = vunpack.c.h.b16 %v169
    %v281 = vunpack.c.l.b16 %v170
    %v282 = vunpack.c.h.b16 %v170
    %v283 = vunpack.c.l.b16 %v171
    %v284 = vunpack.c.h.b16 %v171
    %v285 = vunpack.c.l.b16 %v172
    %v286 = vunpack.c.h.b16 %v172
    %v287 = vunpack.c.l.b16 %v173
    %v288 = vunpack.c.h.b16 %v173
    %v289 = vpack.c.b16 %v259, %v257
    %v290 = vpack.c.b16 %v260, %v258
    %v291 = vpack.c.b16 %v263, %v261
    %v292 = vpack.c.b16 %v264, %v262
    %v293 = vpack.c.b16 %v267, %v265
    %v294 = vpack.c.b16 %v268, %v266
    %v295 = vpack.c.b16 %v271, %v269
    %v296 = vpack.c.b16 %v272, %v270
    %v297 = vpack.c.b16 %v275, %v273
    %v298 = vpack.c.b16 %v276, %v274
    %v299 = vpack.c.b16 %v279, %v277
    %v300 = vpack.c.b16 %v280, %v278
    %v301 = vpack.c.b16 %v283, %v281
    %v302 = vpack.c.b16 %v284, %v282
    %v303 = vpack.c.b16 %v287, %v285
    %v304 = vpack.c.b16 %v288, %v286
    %321 = vmatprep.subr.bf16.mxu0 %v290
    %322 = vmatpush1.bf16.msra.mxu0 %v289
    %323 = vmatprep.subr.bf16.mxu0 %v292
    %324 = vmatpush1.bf16.msra.mxu0 %v291
    %325 = vmatprep.subr.bf16.mxu0 %v294
    %326 = vmatpush1.bf16.msra.mxu0 %v293
    %327 = vmatprep.subr.bf16.mxu0 %v296
    %328 = vmatpush1.bf16.msra.mxu0 %v295
    %329 = vmatprep.subr.bf16.mxu0 %v298
    %330 = vmatpush1.bf16.msra.mxu0 %v297
    %331 = vmatprep.subr.bf16.mxu0 %v300
    %332 = vmatpush1.bf16.msra.mxu0 %v299
    %333 = vmatprep.subr.bf16.mxu0 %v302
    %334 = vmatpush1.bf16.msra.mxu0 %v301
    %335 = vmatprep.subr.bf16.mxu0 %v304
    %336 = vmatpush1.bf16.msra.mxu0 %v303
    %337 = vmatprep.subr.bf16.mxu0 0
    %338 = vmatpush1.bf16.msra.mxu0 0
    %339 = vmatprep.subr.bf16.mxu0 0
    %340 = vmatpush1.bf16.msra.mxu0 0
    %341 = vmatprep.subr.bf16.mxu0 0
    %342 = vmatpush1.bf16.msra.mxu0 0
    %343 = vmatprep.subr.bf16.mxu0 0
    %344 = vmatpush1.bf16.msra.mxu0 0
    %345 = vmatprep.subr.bf16.mxu0 0
    %346 = vmatpush1.bf16.msra.mxu0 0
    %347 = vmatprep.subr.bf16.mxu0 0
    %348 = vmatpush1.bf16.msra.mxu0 0
    %349 = vmatprep.subr.bf16.mxu0 0
    %350 = vmatpush1.bf16.msra.mxu0 0
    %351 = vmatprep.subr.bf16.mxu0 0
    %352 = vmatpush1.bf16.msra.mxu0 0
    %353 = vmatprep.mubr.bf16.mxu0 0
    %354 = vmatmul.mubr.bf16.gmra.mrb[0].mxu0 %v239
    %v355 = vpop.f32.mrb[0].mxu0
    %v356 = vadd.f32 %v227, %v355
    %v357 = vpop.f32.mrb[0].mxu0
    %v358 = vadd.f32 %v229, %v357
    %v359 = vpop.f32.mrb[0].mxu0
    %v360 = vadd.f32 %v231, %v359
    %v361 = vpop.f32.mrb[0].mxu0
    %v362 = vadd.f32 %v233, %v361
    %363 = vdwg.mxu0
    %s364 = smul.u32 0, 256
    %s365 = sshra.s32 %s364, 7
    %s366 = sand.u32 %s364, 127
    %s367 = scalar_lea.vmem %s2, %s365
    %v368 = vld [vmem:[%s367] sm:$0x3]
    %v370 = vlaneseq
    %v371 = vshrl.u32 %v370, 7
    %v372 = vsub.s32 0, %v371
    %v373 = vrot.slane %v368, %v372
    %v374 = vlaneseq
    %v375 = vshrl.u32 %v374, 7
    %v376 = vsub.s32 1, %v375
    %v377 = vrot.slane %v368, %v376
    %v380 = vadd.f32 %v356, %v373
    %v381 = vadd.f32 %v358, %v377
    %v382 = vadd.f32 %v360, %v373
    %v383 = vadd.f32 %v362, %v377
    %384 = vst [vmem:[#allocation6] sm:$0xff] %v380
    %385 = vst [vmem:[#allocation6 + $0x8] sm:$0xff] %v381
    %386 = vst [vmem:[#allocation6 + $0x10] sm:$0xff] %v382
    %387 = vst [vmem:[#allocation6 + $0x18] sm:$0xff] %v383
    // Predicated region
    $region30: #{tpu_custom_call.1} parent=1 // pred_check
      _
    $region31: #{tpu_custom_call.1} parent=1 // pred_check_branch
      %389 = sbr.rel (0) target = $region33
    $region32: #{tpu_custom_call.1} parent=1 // pred_region
      %s391 = ssub.s32 512, 512
      %392 = vsyncadd [#allocation5], %s391
      %s393 = sshll.u32 [#allocation6], 4
      %s394 = int_to_ptr.vmem [resolvable:$true] %s393
      %399 = dma.vmem_to_hbm [thread:$0]  %s394, 512, %s5, [#allocation5], 256, 256, 16
    $region33: #{tpu_custom_call.1} parent=1 // pred_fallthru
      _
    // Predicated region
    $region34: #{tpu_custom_call.1} parent=1 // pred_check
      _
    $region35: #{tpu_custom_call.1} parent=1 // pred_check_branch
      %401 = sbr.rel (0) target = $region37
    $region36: #{tpu_custom_call.1} parent=1 // pred_region
      %402 = dma.done [#allocation5], 512
    $region37: #{tpu_custom_call.1} parent=1 // pred_fallthru
      _
    %403 = vsyncpa [#allocation4], 1
    %404 = vsyncpa [#allocation5], 1

</llo_original>
